<compile_context>
chip_gen: v7x
topology: tpu7x:2x2x1
jax: 0.10.0
libtpu: 0.0.40
codegen_flags: <defaults>
</compile_context>

<pallas_src>
import jax
import jax.numpy as jnp
from jax.experimental import pallas as pl
from jax.experimental.pallas import tpu as pltpu


def _actor_critic_kernel(x_ref, w1_ref, wh_ref, out_ref):
    """Fused fc1+relu, joint actor/critic head, softmax.

    x_ref  : (bB, S+1)   state with an appended ones column (folds fc1 bias)
    w1_ref : (S+1, H)    [w1 ; b1]
    wh_ref : (H+1, A+1)  [[wa | wc] ; [ba | bc]]
    out_ref: (bB, A+1)   lanes 0..A-1 = action_probs, lane A = state_value
    """
    hidden = wh_ref.shape[0] - 1
    n_act = wh_ref.shape[1] - 1

    # ---- fc1 (+ folded bias) + relu : one MXU push -----------------------
    h = jnp.dot(x_ref[...], w1_ref[...], preferred_element_type=jnp.float32)
    h = jnp.maximum(h, 0.0)                                   # (bB, H)

    # ---- joint actor/critic head : one MXU push, bias row on the VPU -----
    head = jnp.dot(h, wh_ref[:hidden, :], preferred_element_type=jnp.float32)
    head = head + wh_ref[hidden:hidden + 1, :]                # (bB, A+1)

    value = head[:, n_act:n_act + 1]                          # (bB, 1)

    if n_act == 2:
        # Closed-form binary softmax: only VPU + EUP, no XLU reductions.
        l0 = head[:, 0:1]
        l1 = head[:, 1:2]
        p0 = 1.0 / (1.0 + jnp.exp(l1 - l0))                   # softmax[..., 0]
        p1 = 1.0 - p0                                         # sums to 1 exactly
        out_ref[...] = jnp.concatenate([p0, p1, value], axis=-1)
    else:
        # Generic path (only the real A logit lanes participate).
        logits = head[:, :n_act]
        m = jnp.max(logits, axis=-1, keepdims=True)
        e = jnp.exp(logits - m)
        probs = e * pl.reciprocal(jnp.sum(e, axis=-1, keepdims=True),
                                  approx=False)
        out_ref[...] = jnp.concatenate([probs, value], axis=-1)


def pack_params(params):
    """Pack the 6 PyTorch-style tensors into 2 kernel operands (do this once)."""
    w1, b1 = params["w1"], params["b1"]
    wa, ba = params["wa"], params["ba"]
    wc, bc = params["wc"], params["bc"]
    w1_aug = jnp.concatenate([w1, b1.reshape(1, -1)], axis=0)     # (S+1, H)
    w_head = jnp.concatenate([wa, wc], axis=1)                    # (H, A+1)
    b_head = jnp.concatenate([ba, bc]).reshape(1, -1)             # (1, A+1)
    wh_aug = jnp.concatenate([w_head, b_head], axis=0)            # (H+1, A+1)
    return w1_aug, wh_aug


def actor_critic_forward(state, packed, *, block_b=None):
    """state: (B, state_dim) f32.  packed: (w1_aug, wh_aug) from pack_params."""
    w1_aug, wh_aug = packed
    B, S = state.shape
    H = w1_aug.shape[1]
    A = wh_aug.shape[1] - 1
    assert w1_aug.shape[0] == S + 1

    # Append a ones column so the fc1 bias rides inside the matmul.
    x_aug = jnp.concatenate([state, jnp.ones((B, 1), state.dtype)], axis=1)

    # Batch tiling: one block for small B, tiled + "parallel" grid for big
    # rollout batches (lets v7x's two TensorCores both get work).
    if block_b is None:
        block_b = B if B <= 256 else 256
    if B % block_b != 0:
        block_b = B
    n_blocks = B // block_b

    out = pl.pallas_call(
        _actor_critic_kernel,
        out_shape=jax.ShapeDtypeStruct((B, A + 1), jnp.float32),
        grid=(n_blocks,),
        in_specs=[
            pl.BlockSpec((block_b, S + 1), lambda i: (i, 0)),
            pl.BlockSpec((S + 1, H), lambda i: (0, 0)),
            pl.BlockSpec((H + 1, A + 1), lambda i: (0, 0)),
        ],
        out_specs=pl.BlockSpec((block_b, A + 1), lambda i: (i, 0)),
        compiler_params=pltpu.CompilerParams(
            dimension_semantics=("parallel",)),
    )(x_aug, w1_aug, wh_aug)

    return out[:, :A], out[:, A:A + 1]


def init_params(key, state_dim, hidden, action_dim):
    """Deterministic synthetic init (PyTorch-Linear-like uniform bounds)."""
    ks = jax.random.split(key, 6)

    def lin(kw, kb, fan_in, fan_out):
        bound = 1.0 / jnp.sqrt(fan_in)
        w = jax.random.uniform(kw, (fan_in, fan_out), jnp.float32, -bound, bound)
        b = jax.random.uniform(kb, (fan_out,), jnp.float32, -bound, bound)
        return w, b

    w1, b1 = lin(ks[0], ks[1], state_dim, hidden)
    wa, ba = lin(ks[2], ks[3], hidden, action_dim)
    wc, bc = lin(ks[4], ks[5], hidden, 1)
    return {"w1": w1, "b1": b1, "wa": wa, "ba": ba, "wc": wc, "bc": bc}


def reference_forward(state, params):
    h = jnp.maximum(state @ params["w1"] + params["b1"], 0.0)
    logits = h @ params["wa"] + params["ba"]
    probs = jax.nn.softmax(logits, axis=-1)
    value = h @ params["wc"] + params["bc"]
    return probs, value


if __name__ == "__main__":
    STATE_DIM = 4      # CartPole-v1 observation dim
    ACTION_DIM = 2     # CartPole-v1 action count
    HIDDEN = 128
    BATCH = 8

    key = jax.random.PRNGKey(0)
    k_state, k_params = jax.random.split(key)

    state = jax.random.normal(k_state, (BATCH, STATE_DIM), dtype=jnp.float32)
    params = init_params(k_params, STATE_DIM, HIDDEN, ACTION_DIM)
    packed = pack_params(params)   # done once, outside the per-step call

    probs, value = actor_critic_forward(state, packed)
    probs = jax.block_until_ready(probs)
    value = jax.block_until_ready(value)

    # Correctness check against plain-JAX reference.
    ref_probs, ref_value = reference_forward(state, params)
    assert probs.shape == (BATCH, ACTION_DIM)
    assert value.shape == (BATCH, 1)
    assert jnp.allclose(probs, ref_probs, atol=1e-5, rtol=1e-5)
    assert jnp.allclose(value, ref_value, atol=1e-5, rtol=1e-5)
    assert jnp.allclose(jnp.sum(probs, axis=-1), 1.0, atol=1e-5)

    print("KERNEL_OK")
</pallas_src>

<mosaic_0001>
module attributes {stable_mosaic.version = 11 : i64} {
  func.func @_actor_critic_kernel(%arg0: i32, %arg1: memref<8x5xf32, #tpu.memory_space<vmem>>, %arg2: memref<5x128xf32, #tpu.memory_space<vmem>>, %arg3: memref<129x3xf32, #tpu.memory_space<vmem>>, %arg4: memref<8x3xf32, #tpu.memory_space<vmem>>) attributes {dimension_semantics = [#tpu.dimension_semantics<parallel>], iteration_bounds = array<i64: 1>, scalar_prefetch = 0 : i64, scratch_operands = 0 : i64, tpu.core_type = #tpu.core_type<tc>, window_params = [{transform_indices = @transform_0, window_bounds = array<i64: 8, 5>}, {pipeline_mode = #tpu.pipeline_mode<synchronous>, transform_indices = @transform_1, window_bounds = array<i64: 5, 128>}, {pipeline_mode = #tpu.pipeline_mode<synchronous>, transform_indices = @transform_2, window_bounds = array<i64: 129, 3>}, {transform_indices = @transform_3, window_bounds = array<i64: 8, 3>}]} {
    %c0 = arith.constant 0 : index
    %c0_0 = arith.constant 0 : index
    %0 = vector.load %arg1[%c0, %c0_0] : memref<8x5xf32, #tpu.memory_space<vmem>>, vector<8x5xf32>
    %c0_1 = arith.constant 0 : index
    %c0_2 = arith.constant 0 : index
    %1 = vector.load %arg2[%c0_1, %c0_2] : memref<5x128xf32, #tpu.memory_space<vmem>>, vector<5x128xf32>
    %cst = arith.constant dense<0.000000e+00> : vector<8x128xf32>
    %2 = tpu.matmul %0, %1, %cst {dimension_numbers = #tpu.dot_dimension_numbers<[1], [0], [0], [1], [0, 0, 1, 1], [], []>} : vector<8x5xf32>, vector<5x128xf32>, vector<8x128xf32> -> vector<8x128xf32>
    %cst_3 = arith.constant 0.000000e+00 : f32
    %3 = vector.broadcast %cst_3 : f32 to vector<8x128xf32>
    %4 = arith.maximumf %2, %3 : vector<8x128xf32>
    %c0_4 = arith.constant 0 : index
    %c0_5 = arith.constant 0 : index
    %5 = vector.load %arg3[%c0_4, %c0_5] : memref<129x3xf32, #tpu.memory_space<vmem>>, vector<128x3xf32>
    %cst_6 = arith.constant dense<0.000000e+00> : vector<8x3xf32>
    %6 = tpu.matmul %4, %5, %cst_6 {dimension_numbers = #tpu.dot_dimension_numbers<[1], [0], [0], [1], [0, 0, 1, 1], [], []>} : vector<8x128xf32>, vector<128x3xf32>, vector<8x3xf32> -> vector<8x3xf32>
    %c128 = arith.constant 128 : index
    %c0_7 = arith.constant 0 : index
    %7 = vector.load %arg3[%c128, %c0_7] : memref<129x3xf32, #tpu.memory_space<vmem>>, vector<1x3xf32>
    %8 = vector.broadcast %7 : vector<1x3xf32> to vector<8x3xf32>
    %9 = arith.addf %6, %8 : vector<8x3xf32>
    %10 = vector.extract_strided_slice %9 {offsets = [0, 2], sizes = [8, 1], strides = [1, 1]} : vector<8x3xf32> to vector<8x1xf32>
    %11 = vector.extract_strided_slice %9 {offsets = [0, 0], sizes = [8, 1], strides = [1, 1]} : vector<8x3xf32> to vector<8x1xf32>
    %12 = vector.extract_strided_slice %9 {offsets = [0, 1], sizes = [8, 1], strides = [1, 1]} : vector<8x3xf32> to vector<8x1xf32>
    %13 = arith.subf %12, %11 : vector<8x1xf32>
    %14 = math.exp %13 : vector<8x1xf32>
    %cst_8 = arith.constant 1.000000e+00 : f32
    %15 = vector.broadcast %cst_8 : f32 to vector<8x1xf32>
    %16 = arith.addf %15, %14 : vector<8x1xf32>
    %cst_9 = arith.constant 1.000000e+00 : f32
    %17 = vector.broadcast %cst_9 : f32 to vector<8x1xf32>
    %18 = arith.divf %17, %16 : vector<8x1xf32>
    %cst_10 = arith.constant 1.000000e+00 : f32
    %19 = vector.broadcast %cst_10 : f32 to vector<8x1xf32>
    %20 = arith.subf %19, %18 : vector<8x1xf32>
    %21 = tpu.concatenate %18, %20, %10 in 1 : vector<8x1xf32>, vector<8x1xf32>, vector<8x1xf32> -> vector<8x3xf32>
    %c0_11 = arith.constant 0 : index
    %c0_12 = arith.constant 0 : index
    %22 = vector.load %arg4[%c0_11, %c0_12] : memref<8x3xf32, #tpu.memory_space<vmem>>, vector<8x3xf32>
    tpu.vector_store %arg4[%c0_11, %c0_12], %21 {strides = array<i32>} : memref<8x3xf32, #tpu.memory_space<vmem>>, vector<8x3xf32>,
    return
  }
  func.func @transform_0(%arg0: i32) -> (i32, i32) {
    %c0_i32 = arith.constant 0 : i32
    %c0_i32_0 = arith.constant 0 : i32
    return %arg0, %c0_i32 : i32, i32
  }
  func.func @transform_1(%arg0: i32) -> (i32, i32) {
    %c0_i32 = arith.constant 0 : i32
    %c0_i32_0 = arith.constant 0 : i32
    %c0_i32_1 = arith.constant 0 : i32
    return %c0_i32, %c0_i32_0 : i32, i32
  }
  func.func @transform_2(%arg0: i32) -> (i32, i32) {
    %c0_i32 = arith.constant 0 : i32
    %c0_i32_0 = arith.constant 0 : i32
    %c0_i32_1 = arith.constant 0 : i32
    return %c0_i32, %c0_i32_0 : i32, i32
  }
  func.func @transform_3(%arg0: i32) -> (i32, i32) {
    %c0_i32 = arith.constant 0 : i32
    %c0_i32_0 = arith.constant 0 : i32
    return %arg0, %c0_i32 : i32, i32
  }
}

</mosaic_0001>

<llo_original>
// kernel: tpu_custom_call.1
$region0: #{tpu_custom_call.1}
  #allocation0 [shape = 'u32[]', space=smem, size = 0x4, offset = 0x4, fixed_abs, tag = 'smem constant byte address 0x4 - core index']
  #allocation1 [shape = 'u32[144,128]{1,0:T(1,128)}', space=vmem, size = 0x12000, scoped, tag = 'internal scratch']
  %s0 = inlined_call_operand.vmem [shape: f32[8,5], index: 0, kind: input, shape index: {}]
  %s1 = inlined_call_operand.vmem [shape: f32[5,128], index: 1, kind: input, shape index: {}]
  %s2 = inlined_call_operand.vmem [shape: f32[129,3], index: 2, kind: input, shape index: {}]
  %s3 = inlined_call_operand.vmem [shape: f32[8,3], index: 3, kind: output, shape index: {}]
  %s4 = sld [smem:[#allocation0]]
  $region22: #{tpu_custom_call.1} parent=0
    _
  %s6 = ssub.s32 1, %s4
  %s7 = scalar_select 0, %s6, %s4
  // Predicated region
  $region2: #{tpu_custom_call.1} parent=0 // pred_check
    _
  $region3: #{tpu_custom_call.1} parent=0 // pred_check_branch
    %9 = sbr.rel (0) target = $region5
  $region4: #{tpu_custom_call.1} parent=0 // pred_region
    _
  $region5: #{tpu_custom_call.1} parent=0 // pred_fallthru
    _
  // Predicated region
  $region6: #{tpu_custom_call.1} parent=0 // pred_check
    _
  $region7: #{tpu_custom_call.1} parent=0 // pred_check_branch
    %11 = sbr.rel (0) target = $region9
  $region8: #{tpu_custom_call.1} parent=0 // pred_region
    _
  $region9: #{tpu_custom_call.1} parent=0 // pred_fallthru
    _
  // Predicated region
  $region10: #{tpu_custom_call.1} parent=0 // pred_check
    _
  $region11: #{tpu_custom_call.1} parent=0 // pred_check_branch
    %13 = sbr.rel (0) target = $region13
  $region12: #{tpu_custom_call.1} parent=0 // pred_region
    _
  $region13: #{tpu_custom_call.1} parent=0 // pred_fallthru
    _
  %v14 = vld [vmem:[%s0] sm:$0xff]
  %v15 = vld [vmem:[%s1] sm:$0x1f]
  %vm16 = vcmask 39936
  %v18 = vsel %vm16, %v14, 0
  %vm20 = vcmask 1044480
  %v22 = vsel %vm20, %v15, 0
  %24 = vmatprep.subr.mxu0 0.0
  %25 = vmatpush1.msra.mxu0 %v22
  %26 = vmatprep.subr.mxu0 0.0
  %27 = vmatpush1.msra.mxu0 0.0
  %28 = vmatprep.subr.mxu0 0.0
  %29 = vmatpush1.msra.mxu0 0.0
  %30 = vmatprep.subr.mxu0 0.0
  %31 = vmatpush1.msra.mxu0 0.0
  %32 = vmatprep.subr.mxu0 0.0
  %33 = vmatpush1.msra.mxu0 0.0
  %34 = vmatprep.subr.mxu0 0.0
  %35 = vmatpush1.msra.mxu0 0.0
  %36 = vmatprep.subr.mxu0 0.0
  %37 = vmatpush1.msra.mxu0 0.0
  %38 = vmatprep.subr.mxu0 0.0
  %39 = vmatpush1.msra.mxu0 0.0
  %40 = vmatprep.subr.mxu0 0.0
  %41 = vmatpush1.msra.mxu0 0.0
  %42 = vmatprep.subr.mxu0 0.0
  %43 = vmatpush1.msra.mxu0 0.0
  %44 = vmatprep.subr.mxu0 0.0
  %45 = vmatpush1.msra.mxu0 0.0
  %46 = vmatprep.subr.mxu0 0.0
  %47 = vmatpush1.msra.mxu0 0.0
  %48 = vmatprep.subr.mxu0 0.0
  %49 = vmatpush1.msra.mxu0 0.0
  %50 = vmatprep.subr.mxu0 0.0
  %51 = vmatpush1.msra.mxu0 0.0
  %52 = vmatprep.subr.mxu0 0.0
  %53 = vmatpush1.msra.mxu0 0.0
  %54 = vmatprep.subr.mxu0 0.0
  %55 = vmatpush1.msra.mxu0 0.0
  %56 = vmatprep.subr.mxu0 0.0
  %57 = vmatpush1.msra.mxu0 0.0
  %58 = vmatprep.subr.mxu0 0.0
  %59 = vmatpush1.msra.mxu0 0.0
  %60 = vmatprep.subr.mxu0 0.0
  %61 = vmatpush1.msra.mxu0 0.0
  %62 = vmatprep.subr.mxu0 0.0
  %63 = vmatpush1.msra.mxu0 0.0
  %64 = vmatprep.subr.mxu0 0.0
  %65 = vmatpush1.msra.mxu0 0.0
  %66 = vmatprep.subr.mxu0 0.0
  %67 = vmatpush1.msra.mxu0 0.0
  %68 = vmatprep.subr.mxu0 0.0
  %69 = vmatpush1.msra.mxu0 0.0
  %70 = vmatprep.subr.mxu0 0.0
  %71 = vmatpush1.msra.mxu0 0.0
  %72 = vmatprep.subr.mxu0 0.0
  %73 = vmatpush1.msra.mxu0 0.0
  %74 = vmatprep.subr.mxu0 0.0
  %75 = vmatpush1.msra.mxu0 0.0
  %76 = vmatprep.subr.mxu0 0.0
  %77 = vmatpush1.msra.mxu0 0.0
  %78 = vmatprep.subr.mxu0 0.0
  %79 = vmatpush1.msra.mxu0 0.0
  %80 = vmatprep.subr.mxu0 0.0
  %81 = vmatpush1.msra.mxu0 0.0
  %82 = vmatprep.subr.mxu0 0.0
  %83 = vmatpush1.msra.mxu0 0.0
  %84 = vmatprep.subr.mxu0 0.0
  %85 = vmatpush1.msra.mxu0 0.0
  %86 = vmatprep.subr.mxu0 0.0
  %87 = vmatpush1.msra.mxu0 0.0
  %88 = vmatprep.mubr.f32.mxu0 0.0
  %89 = vmatmul.mubr.f32.gmra.mrb[0].mxu0 %v18
  %v90 = vpop.f32.mrb[0].mxu0
  %v91 = vadd.f32 0.0, %v90
  %v92 = vpop.f32.mrb[0].mxu0
  %93 = vdwg.mxu0
  %v94 = vmax.f32 %v91, 0.0
  %v95 = vld [vmem:[%s2] sm:$0xff]
  %v96 = vld [vmem:[%s2 + $0x8] sm:$0xff]
  %v97 = vld [vmem:[%s2 + $0x10] sm:$0xff]
  %v98 = vld [vmem:[%s2 + $0x18] sm:$0xff]
  %v99 = vld [vmem:[%s2 + $0x20] sm:$0xff]
  %v100 = vld [vmem:[%s2 + $0x28] sm:$0xff]
  %v101 = vld [vmem:[%s2 + $0x30] sm:$0xff]
  %v102 = vld [vmem:[%s2 + $0x38] sm:$0xff]
  %v103 = vld [vmem:[%s2 + $0x40] sm:$0xff]
  %v104 = vld [vmem:[%s2 + $0x48] sm:$0xff]
  %v105 = vld [vmem:[%s2 + $0x50] sm:$0xff]
  %v106 = vld [vmem:[%s2 + $0x58] sm:$0xff]
  %v107 = vld [vmem:[%s2 + $0x60] sm:$0xff]
  %v108 = vld [vmem:[%s2 + $0x68] sm:$0xff]
  %v109 = vld [vmem:[%s2 + $0x70] sm:$0xff]
  %v110 = vld [vmem:[%s2 + $0x78] sm:$0xff]
  %v111 = vld [vmem:[%s2 + $0x80] sm:$0x1]
  %v112 = vlaneseq
  %v113 = vshrl.u32 %v112, 7
  %v114 = vsub.s32 0, %v113
  %v115 = vrot.slane %v111, %v114
  %116 = vmatprep.subr.mxu0 0.0
  %117 = vmatpush1.msra.mxu0 %v95
  %118 = vmatprep.subr.mxu0 0.0
  %119 = vmatpush1.msra.mxu0 %v96
  %120 = vmatprep.subr.mxu0 0.0
  %121 = vmatpush1.msra.mxu0 %v97
  %122 = vmatprep.subr.mxu0 0.0
  %123 = vmatpush1.msra.mxu0 %v98
  %124 = vmatprep.subr.mxu0 0.0
  %125 = vmatpush1.msra.mxu0 %v99
  %126 = vmatprep.subr.mxu0 0.0
  %127 = vmatpush1.msra.mxu0 %v100
  %128 = vmatprep.subr.mxu0 0.0
  %129 = vmatpush1.msra.mxu0 %v101
  %130 = vmatprep.subr.mxu0 0.0
  %131 = vmatpush1.msra.mxu0 %v102
  %132 = vmatprep.subr.mxu0 0.0
  %133 = vmatpush1.msra.mxu0 %v103
  %134 = vmatprep.subr.mxu0 0.0
  %135 = vmatpush1.msra.mxu0 %v104
  %136 = vmatprep.subr.mxu0 0.0
  %137 = vmatpush1.msra.mxu0 %v105
  %138 = vmatprep.subr.mxu0 0.0
  %139 = vmatpush1.msra.mxu0 %v106
  %140 = vmatprep.subr.mxu0 0.0
  %141 = vmatpush1.msra.mxu0 %v107
  %142 = vmatprep.subr.mxu0 0.0
  %143 = vmatpush1.msra.mxu0 %v108
  %144 = vmatprep.subr.mxu0 0.0
  %145 = vmatpush1.msra.mxu0 %v109
  %146 = vmatprep.subr.mxu0 0.0
  %147 = vmatpush1.msra.mxu0 %v110
  %148 = vmatprep.subr.mxu0 0.0
  %149 = vmatpush1.msra.mxu0 0.0
  %150 = vmatprep.subr.mxu0 0.0
  %151 = vmatpush1.msra.mxu0 0.0
  %152 = vmatprep.subr.mxu0 0.0
  %153 = vmatpush1.msra.mxu0 0.0
  %154 = vmatprep.subr.mxu0 0.0
  %155 = vmatpush1.msra.mxu0 0.0
  %156 = vmatprep.subr.mxu0 0.0
  %157 = vmatpush1.msra.mxu0 0.0
  %158 = vmatprep.subr.mxu0 0.0
  %159 = vmatpush1.msra.mxu0 0.0
  %160 = vmatprep.subr.mxu0 0.0
  %161 = vmatpush1.msra.mxu0 0.0
  %162 = vmatprep.subr.mxu0 0.0
  %163 = vmatpush1.msra.mxu0 0.0
  %164 = vmatprep.subr.mxu0 0.0
  %165 = vmatpush1.msra.mxu0 0.0
  %166 = vmatprep.subr.mxu0 0.0
  %167 = vmatpush1.msra.mxu0 0.0
  %168 = vmatprep.subr.mxu0 0.0
  %169 = vmatpush1.msra.mxu0 0.0
  %170 = vmatprep.subr.mxu0 0.0
  %171 = vmatpush1.msra.mxu0 0.0
  %172 = vmatprep.subr.mxu0 0.0
  %173 = vmatpush1.msra.mxu0 0.0
  %174 = vmatprep.subr.mxu0 0.0
  %175 = vmatpush1.msra.mxu0 0.0
  %176 = vmatprep.subr.mxu0 0.0
  %177 = vmatpush1.msra.mxu0 0.0
  %178 = vmatprep.subr.mxu0 0.0
  %179 = vmatpush1.msra.mxu0 0.0
  %180 = vmatprep.mubr.f32.mxu0 0.0
  %181 = vmatmul.mubr.f32.gmra.mrb[0].mxu0 %v94
  %v182 = vpop.f32.mrb[0].mxu0
  %v183 = vadd.f32 %v115, %v182
  %v184 = vpop.f32.mrb[0].mxu0
  %185 = vdwg.mxu0
  %187 = vrot.lane.b32.xlu0 %v183, 1
  %v188 = vpop.permute.xlu0 %187
  %v190 = vsub.f32 %v183, %v188
  %v191 = vmul.f32 %v190, 1.442695
  %v192 = vpow.pop %v191
  %v193 = vadd.f32 %v192, 1.0
  %v194 = vrcp.pop %v193
  %v195 = vmul.f32 1.0, %v194
  %v196 = vsub.f32 1.0, %v195
  %198 = vrot.lane.b32.xlu0 %v195, 127
  %v199 = vpop.permute.xlu0 %198
  %vm201 = vcmask 7168
  %v202 = vsel %vm201, %v199, %v196
  %vm203 = vcmask 15360
  %v204 = vsel %vm203, %v202, %v183
  %vm205 = vcmask 23552
  %206 = vst.msk [vmem:[%s3] sm:$0xff] %vm205, %v204
  // Predicated region
  $region14: #{tpu_custom_call.1} parent=0 // pred_check
    _
  $region15: #{tpu_custom_call.1} parent=0 // pred_check_branch
    %208 = sbr.rel (0) target = $region17
  $region16: #{tpu_custom_call.1} parent=0 // pred_region
    _
  $region17: #{tpu_custom_call.1} parent=0 // pred_fallthru
    _
  // Predicated region
  $region18: #{tpu_custom_call.1} parent=0 // pred_check
    _
  $region19: #{tpu_custom_call.1} parent=0 // pred_check_branch
    %210 = sbr.rel (0) target = $region21
  $region20: #{tpu_custom_call.1} parent=0 // pred_region
    _
  $region21: #{tpu_custom_call.1} parent=0 // pred_fallthru
    _

</llo_original>
